<compile_context>
chip_gen: v5e
topology: v5e:2x2
jax: 0.10.0
libtpu: 0.0.40
codegen_flags: <defaults>
</compile_context>

<pallas_src>
import functools

import jax
import jax.numpy as jnp
from jax.experimental import pallas as pl
from jax.experimental.pallas import tpu as pltpu


def _round_up(x, m):
    return ((x + m - 1) // m) * m


def _cdiv(a, b):
    return (a + b - 1) // b


def _nn1_kernel(x_ref, w1t_ref, b1_ref, w2_ref, b2_ref, o_ref):
    """One batch tile of NN1: y = relu(x @ W1.T + b1) @ W2.T + b2.

      x_ref  : (TB, D)  batch tile, native row-major layout (streamed)
      w1t_ref: (D, H)   fc1.weight transposed (VMEM-resident across steps)
      b1_ref : (1, H)   fc1.bias  (lane broadcast over hidden)
      w2_ref : (1, H)   out.weight (lane broadcast over hidden)
      b2_ref : (1, 1)   out.bias  (SMEM scalar)
      o_ref  : (TB, 1)  output tile
    """
    # MXU: (TB, D) @ (D, H) with f32 accumulation.
    h = jnp.dot(x_ref[...], w1t_ref[...], preferred_element_type=jnp.float32)
    h = jnp.maximum(h + b1_ref[...], 0.0)
    # Second layer has N=1: VPU multiply + lane (XLU) reduction instead of a
    # degenerate (TB, H) @ (H, 1) MXU matmul.
    y = jnp.sum(h * w2_ref[...], axis=-1, keepdims=True)
    o_ref[...] = (y + b2_ref[0, 0]).astype(o_ref.dtype)


@functools.partial(jax.jit, static_argnames=("batch_tile",))
def nn1_forward(x, w1, b1, w2, b2, *, batch_tile=8192):
    """Pallas implementation of NN1.forward.

    x : (B, input_dim) float32
    w1: (hidden, input_dim)  -- PyTorch fc1.weight layout
    b1: (hidden,)
    w2: (1, hidden)          -- PyTorch out.weight layout
    b2: (1,)
    returns (B, 1) float32
    """
    B, D = x.shape
    H = w1.shape[0]

    # Batch tile: always a multiple of 128 (sublane axis only needs 8, but 128
    # keeps DMAs nicely aligned), never larger than the (rounded) batch, and
    # large by default so the ~0.35 us per-grid-step overhead is amortized.
    tb = min(_round_up(batch_tile, 128), _round_up(B, 128))
    # v7x has 2 TensorCores: give the "parallel" batch axis >= 2 steps when
    # the batch is big enough (harmless on single-TC v5e/v6e).
    if _cdiv(B, tb) < 2 and B > 128:
        tb = _round_up(_cdiv(B, 2), 128)
    grid = (_cdiv(B, tb),)

    # One-time layout plumbing on the tiny weights only; x is passed through
    # untouched (no extra HBM pass over the big input).
    w1_t = w1.T.astype(jnp.float32)                     # (D, H)
    b1_row = b1.reshape(1, H).astype(jnp.float32)       # (1, H)
    w2_row = w2.reshape(1, H).astype(jnp.float32)       # (1, H)
    b2_s = b2.reshape(1, 1).astype(jnp.float32)         # SMEM scalar

    out = pl.pallas_call(
        _nn1_kernel,
        out_shape=jax.ShapeDtypeStruct((B, 1), jnp.float32),
        grid=grid,
        in_specs=[
            # x tiles stream over the batch grid (auto double-buffered);
            # partial final block is masked by Pallas (no wrapper padding).
            pl.BlockSpec((tb, D), lambda i: (i, 0)),
            # Weights / biases stay VMEM-resident across grid steps.
            pl.BlockSpec((D, H), lambda i: (0, 0)),
            pl.BlockSpec((1, H), lambda i: (0, 0)),
            pl.BlockSpec((1, H), lambda i: (0, 0)),
            # Scalar bias in SMEM (no padded VMEM tile for a single value).
            pl.BlockSpec((1, 1), lambda i: (0, 0),
                         memory_space=pltpu.MemorySpace.SMEM),
        ],
        out_specs=pl.BlockSpec((tb, 1), lambda i: (i, 0)),
        compiler_params=pltpu.CompilerParams(
            # Batch steps are independent: shard across v7x's 2 TensorCores.
            dimension_semantics=("parallel",),
            # Headroom above v5e's 16 MiB scoped default; well below v7x's
            # 64 MiB physical VMEM even with the (tb, H) f32 intermediate.
            vmem_limit_bytes=32 * 1024 * 1024,
        ),
    )(x.astype(jnp.float32), w1_t, b1_row, w2_row, b2_s)

    return out


def init_params(key, input_dim, hidden_neurons=128):
    """Deterministic init mirroring nn.Linear's U(-1/sqrt(fan_in), ...) in
    native PyTorch layouts: fc1.weight (H, D), fc1.bias (H,), out.weight (1, H),
    out.bias (1,)."""
    k1, k2, k3, k4 = jax.random.split(key, 4)
    bound1 = 1.0 / jnp.sqrt(jnp.float32(input_dim))
    bound2 = 1.0 / jnp.sqrt(jnp.float32(hidden_neurons))
    w1 = jax.random.uniform(k1, (hidden_neurons, input_dim), jnp.float32,
                            minval=-bound1, maxval=bound1)
    b1 = jax.random.uniform(k2, (hidden_neurons,), jnp.float32,
                            minval=-bound1, maxval=bound1)
    w2 = jax.random.uniform(k3, (1, hidden_neurons), jnp.float32,
                            minval=-bound2, maxval=bound2)
    b2 = jax.random.uniform(k4, (1,), jnp.float32,
                            minval=-bound2, maxval=bound2)
    return w1, b1, w2, b2


def reference_forward(x, w1, b1, w2, b2):
    h = jnp.maximum(x @ w1.T + b1, 0.0)
    return h @ w2.T + b2


if __name__ == "__main__":
    key = jax.random.PRNGKey(0)
    kx, kp, kx2 = jax.random.split(key, 3)

    input_dim = 32
    hidden = 128
    w1, b1, w2, b2 = init_params(kp, input_dim, hidden)

    # Small shape consistent with the module (single grid step, tile > batch).
    batch = 8
    x = jax.random.normal(kx, (batch, input_dim), jnp.float32)
    out = jax.block_until_ready(nn1_forward(x, w1, b1, w2, b2))
    ref = reference_forward(x, w1, b1, w2, b2)
    assert out.shape == (batch, 1)
    assert jnp.allclose(out, ref, atol=1e-5, rtol=1e-5)

    # Larger ragged batch: multi-step grid (2 TC split) + partial last block.
    batch2 = 1030
    x2 = jax.random.normal(kx2, (batch2, input_dim), jnp.float32)
    out2 = jax.block_until_ready(nn1_forward(x2, w1, b1, w2, b2))
    ref2 = reference_forward(x2, w1, b1, w2, b2)
    assert out2.shape == (batch2, 1)
    assert jnp.allclose(out2, ref2, atol=1e-4, rtol=1e-5)

    print("KERNEL_OK")
</pallas_src>

<mosaic_0001>
module attributes {stable_mosaic.version = 11 : i64} {
  func.func @_nn1_kernel(%arg0: i32, %arg1: memref<128x32xf32, #tpu.memory_space<vmem>>, %arg2: memref<32x128xf32, #tpu.memory_space<vmem>>, %arg3: memref<1x128xf32, #tpu.memory_space<vmem>>, %arg4: memref<1x128xf32, #tpu.memory_space<vmem>>, %arg5: memref<1x1xf32, #tpu.memory_space<smem>>, %arg6: memref<128x1xf32, #tpu.memory_space<vmem>>) attributes {dimension_semantics = [#tpu.dimension_semantics<parallel>], iteration_bounds = array<i64: 1>, scalar_prefetch = 0 : i64, scratch_operands = 0 : i64, tpu.core_type = #tpu.core_type<tc>, window_params = [{transform_indices = @transform_0, window_bounds = array<i64: 128, 32>}, {pipeline_mode = #tpu.pipeline_mode<synchronous>, transform_indices = @transform_1, window_bounds = array<i64: 32, 128>}, {pipeline_mode = #tpu.pipeline_mode<synchronous>, transform_indices = @transform_2, window_bounds = array<i64: 1, 128>}, {pipeline_mode = #tpu.pipeline_mode<synchronous>, transform_indices = @transform_3, window_bounds = array<i64: 1, 128>}, {transform_indices = @transform_4, window_bounds = array<i64: 1, 1>}, {transform_indices = @transform_5, window_bounds = array<i64: 128, 1>}]} {
    %c0 = arith.constant 0 : index
    %c0_0 = arith.constant 0 : index
    %0 = vector.load %arg1[%c0, %c0_0] : memref<128x32xf32, #tpu.memory_space<vmem>>, vector<128x32xf32>
    %c0_1 = arith.constant 0 : index
    %c0_2 = arith.constant 0 : index
    %1 = vector.load %arg2[%c0_1, %c0_2] : memref<32x128xf32, #tpu.memory_space<vmem>>, vector<32x128xf32>
    %cst = arith.constant dense<0.000000e+00> : vector<128x128xf32>
    %2 = tpu.matmul %0, %1, %cst {dimension_numbers = #tpu.dot_dimension_numbers<[1], [0], [0], [1], [0, 0, 1, 1], [], []>} : vector<128x32xf32>, vector<32x128xf32>, vector<128x128xf32> -> vector<128x128xf32>
    %c0_3 = arith.constant 0 : index
    %c0_4 = arith.constant 0 : index
    %3 = vector.load %arg3[%c0_3, %c0_4] : memref<1x128xf32, #tpu.memory_space<vmem>>, vector<1x128xf32>
    %4 = vector.broadcast %3 : vector<1x128xf32> to vector<128x128xf32>
    %5 = arith.addf %2, %4 : vector<128x128xf32>
    %cst_5 = arith.constant 0.000000e+00 : f32
    %6 = vector.broadcast %cst_5 : f32 to vector<128x128xf32>
    %7 = arith.maximumf %5, %6 : vector<128x128xf32>
    %c0_6 = arith.constant 0 : index
    %c0_7 = arith.constant 0 : index
    %8 = vector.load %arg4[%c0_6, %c0_7] : memref<1x128xf32, #tpu.memory_space<vmem>>, vector<1x128xf32>
    %9 = vector.broadcast %8 : vector<1x128xf32> to vector<128x128xf32>
    %10 = arith.mulf %7, %9 : vector<128x128xf32>
    %cst_8 = arith.constant dense<0.000000e+00> : vector<128xf32>
    %11 = vector.multi_reduction <add>, %10, %cst_8 [1] : vector<128x128xf32> to vector<128xf32>
    %12 = vector.shape_cast %11 : vector<128xf32> to vector<128x1xf32>
    %c0_9 = arith.constant 0 : index
    %c0_10 = arith.constant 0 : index
    %13 = memref.load %arg5[%c0_9, %c0_10] : memref<1x1xf32, #tpu.memory_space<smem>>
    %14 = vector.broadcast %13 : f32 to vector<128x1xf32>
    %15 = arith.addf %12, %14 : vector<128x1xf32>
    %c0_11 = arith.constant 0 : index
    %c0_12 = arith.constant 0 : index
    %16 = vector.load %arg6[%c0_11, %c0_12] : memref<128x1xf32, #tpu.memory_space<vmem>>, vector<128x1xf32>
    tpu.vector_store %arg6[%c0_11, %c0_12], %15 {strides = array<i32>} : memref<128x1xf32, #tpu.memory_space<vmem>>, vector<128x1xf32>,
    return
  }
  func.func @transform_0(%arg0: i32) -> (i32, i32) {
    %c0_i32 = arith.constant 0 : i32
    %c0_i32_0 = arith.constant 0 : i32
    return %arg0, %c0_i32 : i32, i32
  }
  func.func @transform_1(%arg0: i32) -> (i32, i32) {
    %c0_i32 = arith.constant 0 : i32
    %c0_i32_0 = arith.constant 0 : i32
    %c0_i32_1 = arith.constant 0 : i32
    return %c0_i32, %c0_i32_0 : i32, i32
  }
  func.func @transform_2(%arg0: i32) -> (i32, i32) {
    %c0_i32 = arith.constant 0 : i32
    %c0_i32_0 = arith.constant 0 : i32
    %c0_i32_1 = arith.constant 0 : i32
    return %c0_i32, %c0_i32_0 : i32, i32
  }
  func.func @transform_3(%arg0: i32) -> (i32, i32) {
    %c0_i32 = arith.constant 0 : i32
    %c0_i32_0 = arith.constant 0 : i32
    %c0_i32_1 = arith.constant 0 : i32
    return %c0_i32, %c0_i32_0 : i32, i32
  }
  func.func @transform_4(%arg0: i32) -> (i32, i32) {
    %c0_i32 = arith.constant 0 : i32
    %c0_i32_0 = arith.constant 0 : i32
    %c0_i32_1 = arith.constant 0 : i32
    return %c0_i32, %c0_i32_0 : i32, i32
  }
  func.func @transform_5(%arg0: i32) -> (i32, i32) {
    %c0_i32 = arith.constant 0 : i32
    %c0_i32_0 = arith.constant 0 : i32
    return %arg0, %c0_i32 : i32, i32
  }
}

</mosaic_0001>

<llo_original>
// kernel: nn1_forward.1
$region0: #{nn1_forward.1}
  #allocation0 [shape = 'u32[]', space=smem, size = 0x4, offset = 0x4, fixed_abs, tag = 'smem constant byte address 0x4 - core index']
  #allocation1 [shape = 'u32[72,128]{1,0:T(1,128)}', space=vmem, size = 0x9000, scoped, tag = 'internal scratch']
  #allocation2 [shape = 'f32[1,1]{1,0:T(1,128)S(6)}', space=smem, size = 0x200, scoped, tag = 'scoped memory for nn1_forward.1']
  %s0 = inlined_call_operand.hbm [shape: f32[8,32], index: 0, kind: input, shape index: {}]
  %s1 = inlined_call_operand.hbm [shape: f32[32,128], index: 1, kind: input, shape index: {}]
  %s2 = inlined_call_operand.vmem [shape: f32[1,128], index: 2, kind: input, shape index: {}]
  %s3 = inlined_call_operand.vmem [shape: f32[1,128], index: 3, kind: input, shape index: {}]
  %s4 = inlined_call_operand.<no memory space> [shape: f32[1,1], index: 4, kind: input, shape index: {}]
  %s5 = inlined_call_operand.vmem [shape: f32[8,1], index: 5, kind: output, shape index: {}]
  %s6 = sld [smem:[#allocation0]]
  $region72: #{nn1_forward.1} parent=0
    _
  %s8 = ssub.s32 1, %s6
  %s9 = scalar_select 0, %s8, %s6
  %10 = sst [smem:[#allocation2]] %s4
  $region1: #{nn1_forward.1} parent=0
    #allocation3 [shape = 'u8[65536]{0}', space=vmem, size = 0x10000, scoped, tag = 'input window, operand 0, single buffered']
    #allocation4 [shape = 's32[1]{0}', space=sflag, size = 0x4, scoped, tag = 'scoped memory for nn1_forward.1']
    #allocation5 [shape = 'u8[16384]{0}', space=vmem, size = 0x4000, scoped, tag = 'input window, operand 1, single buffered']
    #allocation6 [shape = 's32[1]{0}', space=sflag, size = 0x4, scoped, tag = 'scoped memory for nn1_forward.1']
    #allocation7 [shape = 'u8[65536]{0}', space=vmem, size = 0x10000, scoped, tag = 'output window, operand 0, single buffered']
    %11 = vsyncpa [#allocation4], 0
    %12 = vsyncpa [#allocation6], 0
    // Predicated region
    $region2: #{nn1_forward.1} parent=1 // pred_check
      _
    $region3: #{nn1_forward.1} parent=1 // pred_check_branch
      %14 = sbr.rel (0) target = $region5
    $region4: #{nn1_forward.1} parent=1 // pred_region
      %16 = vsyncadd [#allocation4], 1920
      %s17 = sshll.u32 %s0, 4
      %s18 = int_to_ptr.hbm [resolvable:$true] %s17
      %s19 = sshll.u32 [#allocation3], 4
      %s20 = int_to_ptr.vmem [resolvable:$true] %s19
      %25 = dma.hbm_to_vmem [thread:$0]  %s18, 128, %s20, [#allocation4], 128, 128, 8
    $region5: #{nn1_forward.1} parent=1 // pred_fallthru
      _
    // Predicated region
    $region6: #{nn1_forward.1} parent=1 // pred_check
      _
    $region7: #{nn1_forward.1} parent=1 // pred_check_branch
      %27 = sbr.rel (0) target = $region9
    $region8: #{nn1_forward.1} parent=1 // pred_region
      %29 = vsyncadd [#allocation6], 0
      %s30 = sshll.u32 %s1, 4
      %s31 = int_to_ptr.hbm [resolvable:$true] %s30
      %s32 = sshll.u32 [#allocation5], 4
      %s33 = int_to_ptr.vmem [resolvable:$true] %s32
      %38 = dma.hbm_to_vmem [thread:$0]  %s31, 512, %s33, [#allocation6], 128, 128, 8
    $region9: #{nn1_forward.1} parent=1 // pred_fallthru
      _
    // Predicated region
    $region10: #{nn1_forward.1} parent=1 // pred_check
      _
    $region11: #{nn1_forward.1} parent=1 // pred_check_branch
      %40 = sbr.rel (0) target = $region13
    $region12: #{nn1_forward.1} parent=1 // pred_region
      _
    $region13: #{nn1_forward.1} parent=1 // pred_fallthru
      _
    // Predicated region
    $region14: #{nn1_forward.1} parent=1 // pred_check
      _
    $region15: #{nn1_forward.1} parent=1 // pred_check_branch
      %42 = sbr.rel (0) target = $region17
    $region16: #{nn1_forward.1} parent=1 // pred_region
      _
    $region17: #{nn1_forward.1} parent=1 // pred_fallthru
      _
    // Predicated region
    $region18: #{nn1_forward.1} parent=1 // pred_check
      _
    $region19: #{nn1_forward.1} parent=1 // pred_check_branch
      %44 = sbr.rel (0) target = $region21
    $region20: #{nn1_forward.1} parent=1 // pred_region
      _
    $region21: #{nn1_forward.1} parent=1 // pred_fallthru
      _
    // Predicated region
    $region22: #{nn1_forward.1} parent=1 // pred_check
      _
    $region23: #{nn1_forward.1} parent=1 // pred_check_branch
      %46 = sbr.rel (0) target = $region25
    $region24: #{nn1_forward.1} parent=1 // pred_region
      %48 = dma.done [#allocation4], 2048
    $region25: #{nn1_forward.1} parent=1 // pred_fallthru
      _
    // Predicated region
    $region26: #{nn1_forward.1} parent=1 // pred_check
      _
    $region27: #{nn1_forward.1} parent=1 // pred_check_branch
      %50 = sbr.rel (0) target = $region29
    $region28: #{nn1_forward.1} parent=1 // pred_region
      %52 = dma.done [#allocation6], 512
    $region29: #{nn1_forward.1} parent=1 // pred_fallthru
      _
    %v53 = vld [vmem:[#allocation3] sm:$0xff]
    %v54 = vld [vmem:[#allocation3 + $0x8] sm:$0xff]
    %v55 = vld [vmem:[#allocation3 + $0x10] sm:$0xff]
    %v56 = vld [vmem:[#allocation3 + $0x18] sm:$0xff]
    %v57 = vld [vmem:[#allocation3 + $0x20] sm:$0xff]
    %v58 = vld [vmem:[#allocation3 + $0x28] sm:$0xff]
    %v59 = vld [vmem:[#allocation3 + $0x30] sm:$0xff]
    %v60 = vld [vmem:[#allocation3 + $0x38] sm:$0xff]
    %v61 = vld [vmem:[#allocation3 + $0x40] sm:$0xff]
    %v62 = vld [vmem:[#allocation3 + $0x48] sm:$0xff]
    %v63 = vld [vmem:[#allocation3 + $0x50] sm:$0xff]
    %v64 = vld [vmem:[#allocation3 + $0x58] sm:$0xff]
    %v65 = vld [vmem:[#allocation3 + $0x60] sm:$0xff]
    %v66 = vld [vmem:[#allocation3 + $0x68] sm:$0xff]
    %v67 = vld [vmem:[#allocation3 + $0x70] sm:$0xff]
    %v68 = vld [vmem:[#allocation3 + $0x78] sm:$0xff]
    %v69 = vld [vmem:[#allocation5] sm:$0xff]
    %v70 = vld [vmem:[#allocation5 + $0x8] sm:$0xff]
    %v71 = vld [vmem:[#allocation5 + $0x10] sm:$0xff]
    %v72 = vld [vmem:[#allocation5 + $0x18] sm:$0xff]
    %v73 = vld [vmem:[%s2] sm:$0x1]
    %v75 = vperm.slane %v73, 0
    %vm77 = vcmask 261120
    %v79 = vsel %vm77, %v53, 0
    %v82 = vsel %vm77, %v54, 0
    %v85 = vsel %vm77, %v55, 0
    %v88 = vsel %vm77, %v56, 0
    %v91 = vsel %vm77, %v57, 0
    %v94 = vsel %vm77, %v58, 0
    %v97 = vsel %vm77, %v59, 0
    %v100 = vsel %vm77, %v60, 0
    %v103 = vsel %vm77, %v61, 0
    %v106 = vsel %vm77, %v62, 0
    %v109 = vsel %vm77, %v63, 0
    %v112 = vsel %vm77, %v64, 0
    %v115 = vsel %vm77, %v65, 0
    %v118 = vsel %vm77, %v66, 0
    %v121 = vsel %vm77, %v67, 0
    %v124 = vsel %vm77, %v68, 0
    %126 = vmatpush.msra.mxu0 0.0
    %127 = vmatpush.msra.mxu0 0.0
    %128 = vmatpush.msra.mxu0 0.0
    %129 = vmatpush.msra.mxu0 0.0
    %130 = vmatpush.msra.mxu0 0.0
    %131 = vmatpush.msra.mxu0 0.0
    %132 = vmatpush.msra.mxu0 0.0
    %133 = vmatpush.msra.mxu0 0.0
    %134 = vmatpush.msra.mxu0 0.0
    %135 = vmatpush.msra.mxu0 0.0
    %136 = vmatpush.msra.mxu0 0.0
    %137 = vmatpush.msra.mxu0 0.0
    %138 = vmatpush.msra.mxu0 %v72
    %139 = vmatpush.msra.mxu0 %v71
    %140 = vmatpush.msra.mxu0 %v70
    %141 = vmatpush.msra.mxu0 %v69
    %142 = vmatmul.f32.gmra.mxu0 %v79
    %v143 = vpop.f32.mrf.mxu0
    %v144 = vadd.f32 %v75, %v143
    %145 = vmatmul.f32.gmra.mxu0 %v82
    %v146 = vpop.f32.mrf.mxu0
    %v147 = vadd.f32 %v75, %v146
    %148 = vmatmul.f32.gmra.mxu0 %v85
    %v149 = vpop.f32.mrf.mxu0
    %v150 = vadd.f32 %v75, %v149
    %151 = vmatmul.f32.gmra.mxu0 %v88
    %v152 = vpop.f32.mrf.mxu0
    %v153 = vadd.f32 %v75, %v152
    %154 = vmatmul.f32.gmra.mxu0 %v91
    %v155 = vpop.f32.mrf.mxu0
    %v156 = vadd.f32 %v75, %v155
    %157 = vmatmul.f32.gmra.mxu0 %v94
    %v158 = vpop.f32.mrf.mxu0
    %v159 = vadd.f32 %v75, %v158
    %160 = vmatmul.f32.gmra.mxu0 %v97
    %v161 = vpop.f32.mrf.mxu0
    %v162 = vadd.f32 %v75, %v161
    %163 = vmatmul.f32.gmra.mxu0 %v100
    %v164 = vpop.f32.mrf.mxu0
    %v165 = vadd.f32 %v75, %v164
    %166 = vmatmul.f32.gmra.mxu0 %v103
    %v167 = vpop.f32.mrf.mxu0
    %v168 = vadd.f32 %v75, %v167
    %169 = vmatmul.f32.gmra.mxu0 %v106
    %v170 = vpop.f32.mrf.mxu0
    %v171 = vadd.f32 %v75, %v170
    %172 = vmatmul.f32.gmra.mxu0 %v109
    %v173 = vpop.f32.mrf.mxu0
    %v174 = vadd.f32 %v75, %v173
    %175 = vmatmul.f32.gmra.mxu0 %v112
    %v176 = vpop.f32.mrf.mxu0
    %v177 = vadd.f32 %v75, %v176
    %178 = vmatmul.f32.gmra.mxu0 %v115
    %v179 = vpop.f32.mrf.mxu0
    %v180 = vadd.f32 %v75, %v179
    %181 = vmatmul.f32.gmra.mxu0 %v118
    %v182 = vpop.f32.mrf.mxu0
    %v183 = vadd.f32 %v75, %v182
    %184 = vmatmul.f32.gmra.mxu0 %v121
    %v185 = vpop.f32.mrf.mxu0
    %v186 = vadd.f32 %v75, %v185
    %187 = vmatmul.f32.gmra.mxu0 %v124
    %v188 = vpop.f32.mrf.mxu0
    %v189 = vadd.f32 %v75, %v188
    %190 = vdwg.mxu0
    %v191 = vmax.f32 %v144, 0.0
    %v192 = vmax.f32 %v147, 0.0
    %v193 = vmax.f32 %v150, 0.0
    %v194 = vmax.f32 %v153, 0.0
    %v195 = vmax.f32 %v156, 0.0
    %v196 = vmax.f32 %v159, 0.0
    %v197 = vmax.f32 %v162, 0.0
    %v198 = vmax.f32 %v165, 0.0
    %v199 = vmax.f32 %v168, 0.0
    %v200 = vmax.f32 %v171, 0.0
    %v201 = vmax.f32 %v174, 0.0
    %v202 = vmax.f32 %v177, 0.0
    %v203 = vmax.f32 %v180, 0.0
    %v204 = vmax.f32 %v183, 0.0
    %v205 = vmax.f32 %v186, 0.0
    %v206 = vmax.f32 %v189, 0.0
    %v207 = vld [vmem:[%s3] sm:$0x1]
    %v209 = vperm.slane %v207, 0
    %v211 = vmul.f32 %v191, %v209
    %v212 = vmul.f32 %v192, %v209
    %v213 = vmul.f32 %v193, %v209
    %v214 = vmul.f32 %v194, %v209
    %v215 = vmul.f32 %v195, %v209
    %v216 = vmul.f32 %v196, %v209
    %v217 = vmul.f32 %v197, %v209
    %v218 = vmul.f32 %v198, %v209
    %v219 = vmul.f32 %v199, %v209
    %v220 = vmul.f32 %v200, %v209
    %v221 = vmul.f32 %v201, %v209
    %v222 = vmul.f32 %v202, %v209
    %v223 = vmul.f32 %v203, %v209
    %v224 = vmul.f32 %v204, %v209
    %v225 = vmul.f32 %v205, %v209
    %v226 = vmul.f32 %v206, %v209
    %227 = vadd.xlane.f32.xlu0 %v211
    %v228 = vpop.xlane.xlu0 %227
    %229 = vadd.xlane.f32.xlu0 %v212
    %v230 = vpop.xlane.xlu0 %229
    %231 = vadd.xlane.f32.xlu0 %v213
    %v232 = vpop.xlane.xlu0 %231
    %233 = vadd.xlane.f32.xlu0 %v214
    %v234 = vpop.xlane.xlu0 %233
    %235 = vadd.xlane.f32.xlu0 %v215
    %v236 = vpop.xlane.xlu0 %235
    %237 = vadd.xlane.f32.xlu0 %v216
    %v238 = vpop.xlane.xlu0 %237
    %239 = vadd.xlane.f32.xlu0 %v217
    %v240 = vpop.xlane.xlu0 %239
    %241 = vadd.xlane.f32.xlu0 %v218
    %v242 = vpop.xlane.xlu0 %241
    %243 = vadd.xlane.f32.xlu0 %v219
    %v244 = vpop.xlane.xlu0 %243
    %245 = vadd.xlane.f32.xlu0 %v220
    %v246 = vpop.xlane.xlu0 %245
    %247 = vadd.xlane.f32.xlu0 %v221
    %v248 = vpop.xlane.xlu0 %247
    %249 = vadd.xlane.f32.xlu0 %v222
    %v250 = vpop.xlane.xlu0 %249
    %251 = vadd.xlane.f32.xlu0 %v223
    %v252 = vpop.xlane.xlu0 %251
    %253 = vadd.xlane.f32.xlu0 %v224
    %v254 = vpop.xlane.xlu0 %253
    %255 = vadd.xlane.f32.xlu0 %v225
    %v256 = vpop.xlane.xlu0 %255
    %257 = vadd.xlane.f32.xlu0 %v226
    %v258 = vpop.xlane.xlu0 %257
    %s259 = sld [smem:[#allocation2]]
    %v260 = vstv %s259
    %v261 = vadd.f32 %v228, %v260
    %v262 = vadd.f32 %v230, %v260
    %v263 = vadd.f32 %v232, %v260
    %v264 = vadd.f32 %v234, %v260
    %v265 = vadd.f32 %v236, %v260
    %v266 = vadd.f32 %v238, %v260
    %v267 = vadd.f32 %v240, %v260
    %v268 = vadd.f32 %v242, %v260
    %v269 = vadd.f32 %v244, %v260
    %v270 = vadd.f32 %v246, %v260
    %v271 = vadd.f32 %v248, %v260
    %v272 = vadd.f32 %v250, %v260
    %v273 = vadd.f32 %v252, %v260
    %v274 = vadd.f32 %v254, %v260
    %v275 = vadd.f32 %v256, %v260
    %v276 = vadd.f32 %v258, %v260
    %vm277 = vcmask 7168
    %278 = vst.msk [vmem:[#allocation7] sm:$0xff] %vm277, %v261
    %279 = vst.msk [vmem:[#allocation7 + $0x8] sm:$0xff] %vm277, %v262
    %280 = vst.msk [vmem:[#allocation7 + $0x10] sm:$0xff] %vm277, %v263
    %281 = vst.msk [vmem:[#allocation7 + $0x18] sm:$0xff] %vm277, %v264
    %282 = vst.msk [vmem:[#allocation7 + $0x20] sm:$0xff] %vm277, %v265
    %283 = vst.msk [vmem:[#allocation7 + $0x28] sm:$0xff] %vm277, %v266
    %284 = vst.msk [vmem:[#allocation7 + $0x30] sm:$0xff] %vm277, %v267
    %285 = vst.msk [vmem:[#allocation7 + $0x38] sm:$0xff] %vm277, %v268
    %286 = vst.msk [vmem:[#allocation7 + $0x40] sm:$0xff] %vm277, %v269
    %287 = vst.msk [vmem:[#allocation7 + $0x48] sm:$0xff] %vm277, %v270
    %288 = vst.msk [vmem:[#allocation7 + $0x50] sm:$0xff] %vm277, %v271
    %289 = vst.msk [vmem:[#allocation7 + $0x58] sm:$0xff] %vm277, %v272
    %290 = vst.msk [vmem:[#allocation7 + $0x60] sm:$0xff] %vm277, %v273
    %291 = vst.msk [vmem:[#allocation7 + $0x68] sm:$0xff] %vm277, %v274
    %292 = vst.msk [vmem:[#allocation7 + $0x70] sm:$0xff] %vm277, %v275
    %293 = vst.msk [vmem:[#allocation7 + $0x78] sm:$0xff] %vm277, %v276
    // Predicated region
    $region30: #{nn1_forward.1} parent=1 // pred_check
      _
    $region31: #{nn1_forward.1} parent=1 // pred_check_branch
      %295 = sbr.rel (0) target = $region33
    $region32: #{nn1_forward.1} parent=1 // pred_region
      // Predicated region
      $region34: #{nn1_forward.1} parent=32 // pred_check
        _
      $region35: #{nn1_forward.1} parent=32 // pred_check_branch
        %297 = sbr.rel (0) target = $region37
      $region36: #{nn1_forward.1} parent=32 // pred_region
        // Predicated region
        $region38: #{nn1_forward.1} parent=36 // pred_check
          _
        $region39: #{nn1_forward.1} parent=36 // pred_check_branch
          %299 = sbr.rel (0) target = $region41
        $region40: #{nn1_forward.1} parent=36 // pred_region
          // Predicated region
          $region53: #{nn1_forward.1} parent=40 // pred_check
            _
          $region54: #{nn1_forward.1} parent=40 // pred_check_branch
            %315 = sbr.rel (0) target = $region56
          $region55: #{nn1_forward.1} parent=40 // pred_region
            loop: start=0, step=1, limit=1
            $region57: #{nn1_forward.1} parent=55 // loop_pre_header
              _
            $region58: #{nn1_forward.1} parent=55 // loop_header
              %s317 = sphi 0, %s321
              %p318 = scmp.ge.s32.totalorder %s317, 1
              %s322 = sphi [#allocation7], [#allocation7]
              %s323 = sphi %s5, %s5
            $region59: #{nn1_forward.1} parent=55 // loop_header_branch
              %320 = sbr.rel (%p318) target = $region63
            $region60: #{nn1_forward.1} parent=55 // loop_body
              %v324 = vld [vmem:[%s322] sm:$0xff]
              %325 = vst [vmem:[%s323] sm:$0xff] %v324
            $region61: #{nn1_forward.1} parent=55 // loop_footer
              %s321 = sadd.s32 1, %s317
            $region62: #{nn1_forward.1} parent=55 // loop_footer_branch
              %316 = sbr.rel target = $region58
            $region63: #{nn1_forward.1} parent=55 // loop_exit
              _
          $region56: #{nn1_forward.1} parent=40 // pred_fallthru
            _
          // Predicated region
          $region64: #{nn1_forward.1} parent=40 // pred_check
            _
          $region65: #{nn1_forward.1} parent=40 // pred_check_branch
            %327 = sbr.rel target = $region67
          $region66: #{nn1_forward.1} parent=40 // pred_region
            _
          $region67: #{nn1_forward.1} parent=40 // pred_fallthru
            _
        $region41: #{nn1_forward.1} parent=36 // pred_fallthru
          _
        // Predicated region
        $region42: #{nn1_forward.1} parent=36 // pred_check
          _
        $region43: #{nn1_forward.1} parent=36 // pred_check_branch
          %301 = sbr.rel target = $region45
        $region44: #{nn1_forward.1} parent=36 // pred_region
          %s303 = ssub.s32 256, 1
          loop: start=0, step=1, limit=1
          $region46: #{nn1_forward.1} parent=44 // loop_pre_header
            _
          $region47: #{nn1_forward.1} parent=44 // loop_header
            %s305 = sphi 0, %s309
            %p306 = scmp.ge.s32.totalorder %s305, 1
            %s310 = sphi [#allocation7], [#allocation7]
            %s311 = sphi %s5, %s5
          $region48: #{nn1_forward.1} parent=44 // loop_header_branch
            %308 = sbr.rel (%p306) target = $region52
          $region49: #{nn1_forward.1} parent=44 // loop_body
            %v312 = vld [vmem:[%s310] sm:%s303]
            %313 = vst [vmem:[%s311] sm:%s303] %v312
          $region50: #{nn1_forward.1} parent=44 // loop_footer
            %s309 = sadd.s32 1, %s305
          $region51: #{nn1_forward.1} parent=44 // loop_footer_branch
            %304 = sbr.rel target = $region47
          $region52: #{nn1_forward.1} parent=44 // loop_exit
            _
        $region45: #{nn1_forward.1} parent=36 // pred_fallthru
          _
      $region37: #{nn1_forward.1} parent=32 // pred_fallthru
        _
      %328 = vnop
    $region33: #{nn1_forward.1} parent=1 // pred_fallthru
      _
    // Predicated region
    $region68: #{nn1_forward.1} parent=1 // pred_check
      _
    $region69: #{nn1_forward.1} parent=1 // pred_check_branch
      %330 = sbr.rel (0) target = $region71
    $region70: #{nn1_forward.1} parent=1 // pred_region
      _
    $region71: #{nn1_forward.1} parent=1 // pred_fallthru
      _
    %331 = vsyncpa [#allocation4], 1
    %332 = vsyncpa [#allocation6], 1

</llo_original>
